<compile_context>
chip_gen: v5e
topology: v5e:2x2
jax: 0.10.0
libtpu: 0.0.40
codegen_flags: <defaults>
</compile_context>

<pallas_src>
import functools

import jax
import jax.numpy as jnp
import numpy as np
from jax.experimental import pallas as pl
from jax.experimental.pallas import tpu as pltpu

BETA = 0.5
GAMMA = 0.5


def _roll_up(x, k, axis):
    """Circular shift bringing element i+k to index i (== np.roll(x, -k, axis)).

    Uses a non-negative shift so it lowers cleanly to the XLU rotate.
    """
    n = x.shape[axis]
    return pltpu.roll(x, (-k) % n, axis)


def _loss_kernel(tgt_ref, fo_ref, ex_ref, u_ref, v_ref,
                 se_fo_ref, se_ex_ref, phys_ref,
                 *, top, left, crop):
    """One grid step = one batch element.

    tgt/fo/ex refs: (1, C, H, W) full (uncropped) frame blocks in VMEM.
    u/v refs:       (1, 1, H, W) motion-field channel blocks in VMEM.
    Outputs: three (1, 1) f32 un-normalized sums, resident in SMEM across the grid.
    """
    b = pl.program_id(0)

    @pl.when(b == 0)
    def _init():
        se_fo_ref[0, 0] = 0.0
        se_ex_ref[0, 0] = 0.0
        phys_ref[0, 0] = 0.0

    t = tgt_ref[0].astype(jnp.float32)      # (C, H, W)
    f = fo_ref[0].astype(jnp.float32)
    _, H, W = t.shape

    rows = jax.lax.broadcasted_iota(jnp.int32, (H, W), 0)
    cols = jax.lax.broadcasted_iota(jnp.int32, (H, W), 1)
    crop_mask = ((rows >= top) & (rows < top + crop)
                 & (cols >= left) & (cols < left + crop))[None]   # (1, H, W)

    # Squared error of final_output vs target, restricted to the center crop.
    d_fo = jnp.where(crop_mask, f - t, 0.0)
    se_fo_ref[0, 0] += jnp.sum(d_fo * d_fo)

    # Second residual loaded only after the first sum (lower f32 live pressure).
    e = ex_ref[0].astype(jnp.float32)
    d_ex = jnp.where(crop_mask, e - t, 0.0)
    se_ex_ref[0, 0] += jnp.sum(d_ex * d_ex)

    # Physics term: divergence of Sobel gradients, separable form on XLU rolls.
    u = u_ref[0, 0].astype(jnp.float32)     # (H, W)
    v = v_ref[0, 0].astype(jnp.float32)

    # sobel_x = [[-1,0,1],[-2,0,2],[-1,0,1]] (cross-correlation, valid):
    #   du[i,j] = blur_y(u)[i, j+2] - blur_y(u)[i, j],  blur_y = (1,2,1) along H
    blur_u = u + 2.0 * _roll_up(u, 1, 0) + _roll_up(u, 2, 0)
    du = _roll_up(blur_u, 2, 1) - blur_u
    # sobel_y = [[-1,-2,-1],[0,0,0],[1,2,1]]:
    #   dv[i,j] = blur_x(v)[i+2, j] - blur_x(v)[i, j],  blur_x = (1,2,1) along W
    blur_v = v + 2.0 * _roll_up(v, 1, 1) + _roll_up(v, 2, 1)
    dv = _roll_up(blur_v, 2, 0) - blur_v

    # Valid-convolution output footprint (circular wrap from the rolls is masked).
    valid = (rows < H - 2) & (cols < W - 2)
    phys_ref[0, 0] += jnp.sum(jnp.where(valid, jnp.abs(du + dv), 0.0))


def conservation_law_loss(target, extrapolated, final_output, motion_field, stage,
                          beta=BETA, gamma=GAMMA, crop_size=12):
    B, C, H, W = target.shape
    assert motion_field.shape == (B, 2, H, W)

    # torchvision TF.center_crop rounding: top = round((H - size) / 2)
    top = int(round((H - crop_size) / 2.0))
    left = int(round((W - crop_size) / 2.0))

    kernel = functools.partial(_loss_kernel, top=top, left=left, crop=crop_size)

    itemsize = max(target.dtype.itemsize, motion_field.dtype.itemsize)
    block_bytes = (3 * C + 2) * H * W * itemsize           # per-step input blocks
    # double-buffered blocks + generous headroom, clamped to a safe range
    vmem_limit = int(min(max(4 * block_bytes + (4 << 20), 16 << 20), 100 << 20))

    flops = int(B * H * W * (6 * C + 22))
    bytes_accessed = int((3 * B * C * H * W + 2 * B * H * W) * itemsize + 3 * 4)

    se_fo, se_ex, phys_sum = pl.pallas_call(
        kernel,
        grid=(B,),
        out_shape=(
            jax.ShapeDtypeStruct((1, 1), jnp.float32),
            jax.ShapeDtypeStruct((1, 1), jnp.float32),
            jax.ShapeDtypeStruct((1, 1), jnp.float32),
        ),
        in_specs=[
            pl.BlockSpec((1, C, H, W), lambda b: (b, 0, 0, 0)),   # target
            pl.BlockSpec((1, C, H, W), lambda b: (b, 0, 0, 0)),   # final_output
            pl.BlockSpec((1, C, H, W), lambda b: (b, 0, 0, 0)),   # extrapolated
            pl.BlockSpec((1, 1, H, W), lambda b: (b, 0, 0, 0)),   # motion u
            pl.BlockSpec((1, 1, H, W), lambda b: (b, 1, 0, 0)),   # motion v
        ],
        out_specs=(
            pl.BlockSpec(memory_space=pltpu.MemorySpace.SMEM),
            pl.BlockSpec(memory_space=pltpu.MemorySpace.SMEM),
            pl.BlockSpec(memory_space=pltpu.MemorySpace.SMEM),
        ),
        compiler_params=pltpu.CompilerParams(
            dimension_semantics=("arbitrary",),   # batch is the accumulation axis
            vmem_limit_bytes=vmem_limit,
        ),
        cost_estimate=pl.CostEstimate(
            flops=flops, transcendentals=0, bytes_accessed=bytes_accessed),
    )(target, final_output, extrapolated, motion_field, motion_field)

    n_crop = B * C * crop_size * crop_size      # MSE mean over cropped elements
    criterion_loss = se_fo[0, 0] / n_crop
    extra_criterion_loss = se_ex[0, 0] / n_crop
    # Original normalizes by the full H*W, not the valid-conv output size.
    physics_loss = phys_sum[0, 0] / (B * H * W)

    if stage == 'valid' or stage == 'test':
        return (criterion_loss, criterion_loss, extra_criterion_loss, physics_loss)

    total = ((1.0 - beta) * (1.0 - gamma) * criterion_loss
             + (1.0 - beta) * gamma * extra_criterion_loss
             + beta * physics_loss)
    return (total, criterion_loss, extra_criterion_loss, physics_loss)


def _reference(target, extrapolated, final_output, motion_field, stage,
               beta=BETA, gamma=GAMMA, crop_size=12):
    """Pure-JAX reference mirroring the PyTorch module's math."""
    def crop(x):
        Hh, Ww = x.shape[-2], x.shape[-1]
        tp = int(round((Hh - crop_size) / 2.0))
        lf = int(round((Ww - crop_size) / 2.0))
        return x[..., tp:tp + crop_size, lf:lf + crop_size]

    crit = jnp.mean((crop(final_output).astype(jnp.float32)
                     - crop(target).astype(jnp.float32)) ** 2)
    extra = jnp.mean((crop(extrapolated).astype(jnp.float32)
                      - crop(target).astype(jnp.float32)) ** 2)

    u = motion_field[:, 0].astype(jnp.float32)
    v = motion_field[:, 1].astype(jnp.float32)
    H, W = u.shape[-2], u.shape[-1]
    du = (-u[:, 0:H - 2, 0:W - 2] + u[:, 0:H - 2, 2:W]
          - 2 * u[:, 1:H - 1, 0:W - 2] + 2 * u[:, 1:H - 1, 2:W]
          - u[:, 2:H, 0:W - 2] + u[:, 2:H, 2:W])
    dv = (-v[:, 0:H - 2, 0:W - 2] - 2 * v[:, 0:H - 2, 1:W - 1] - v[:, 0:H - 2, 2:W]
          + v[:, 2:H, 0:W - 2] + 2 * v[:, 2:H, 1:W - 1] + v[:, 2:H, 2:W])
    phys = jnp.sum(jnp.abs(du + dv)) / (motion_field.shape[0] * H * W)

    if stage in ('valid', 'test'):
        return (crit, crit, extra, phys)
    total = (1 - beta) * (1 - gamma) * crit + (1 - beta) * gamma * extra + beta * phys
    return (total, crit, extra, phys)


if __name__ == "__main__":
    key = jax.random.PRNGKey(0)
    k1, k2, k3, k4 = jax.random.split(key, 4)
    B, C, H, W = 2, 4, 16, 16
    target = jax.random.normal(k1, (B, C, H, W), jnp.float32)
    extrapolated = jax.random.normal(k2, (B, C, H, W), jnp.float32)
    final_output = jax.random.normal(k3, (B, C, H, W), jnp.float32)
    motion_field = jax.random.normal(k4, (B, 2, H, W), jnp.float32)

    out = conservation_law_loss(target, extrapolated, final_output, motion_field,
                                stage='train')
    out = jax.block_until_ready(out)

    ref = _reference(target, extrapolated, final_output, motion_field, stage='train')
    ref = jax.block_until_ready(ref)
    for got, want in zip(out, ref):
        np.testing.assert_allclose(np.asarray(got), np.asarray(want),
                                   rtol=1e-5, atol=1e-5)

    print("KERNEL_OK")
</pallas_src>

<mosaic_0001>
module attributes {stable_mosaic.version = 11 : i64} {
  func.func @_loss_kernel(%arg0: i32, %arg1: memref<1x4x16x16xf32, #tpu.memory_space<vmem>>, %arg2: memref<1x4x16x16xf32, #tpu.memory_space<vmem>>, %arg3: memref<1x4x16x16xf32, #tpu.memory_space<vmem>>, %arg4: memref<1x1x16x16xf32, #tpu.memory_space<vmem>>, %arg5: memref<1x1x16x16xf32, #tpu.memory_space<vmem>>, %arg6: memref<1x1xf32, #tpu.memory_space<smem>>, %arg7: memref<1x1xf32, #tpu.memory_space<smem>>, %arg8: memref<1x1xf32, #tpu.memory_space<smem>>) attributes {dimension_semantics = [#tpu.dimension_semantics<arbitrary>], iteration_bounds = array<i64: 2>, scalar_prefetch = 0 : i64, scratch_operands = 0 : i64, tpu.core_type = #tpu.core_type<tc>, window_params = [{transform_indices = @transform_0, window_bounds = array<i64: 1, 4, 16, 16>}, {transform_indices = @transform_1, window_bounds = array<i64: 1, 4, 16, 16>}, {transform_indices = @transform_2, window_bounds = array<i64: 1, 4, 16, 16>}, {transform_indices = @transform_3, window_bounds = array<i64: 1, 1, 16, 16>}, {transform_indices = @transform_4, window_bounds = array<i64: 1, 1, 16, 16>}, {transform_indices = @transform_5, window_bounds = array<i64: 1, 1>}, {transform_indices = @transform_6, window_bounds = array<i64: 1, 1>}, {transform_indices = @transform_7, window_bounds = array<i64: 1, 1>}]} {
    %c0_i32 = arith.constant 0 : i32
    %0 = arith.cmpi eq, %arg0, %c0_i32 : i32
    %1 = arith.extui %0 : i1 to i32
    %c0_i32_0 = arith.constant 0 : i32
    %2 = arith.cmpi ne, %1, %c0_i32_0 : i32
    scf.if %2 {
      %cst_48 = arith.constant 0.000000e+00 : f32
      %c0_49 = arith.constant 0 : index
      %c0_50 = arith.constant 0 : index
      %85 = memref.load %arg6[%c0_49, %c0_50] : memref<1x1xf32, #tpu.memory_space<smem>>
      memref.store %cst_48, %arg6[%c0_49, %c0_50] : memref<1x1xf32, #tpu.memory_space<smem>>
      %cst_51 = arith.constant 0.000000e+00 : f32
      %c0_52 = arith.constant 0 : index
      %c0_53 = arith.constant 0 : index
      %86 = memref.load %arg7[%c0_52, %c0_53] : memref<1x1xf32, #tpu.memory_space<smem>>
      memref.store %cst_51, %arg7[%c0_52, %c0_53] : memref<1x1xf32, #tpu.memory_space<smem>>
      %cst_54 = arith.constant 0.000000e+00 : f32
      %c0_55 = arith.constant 0 : index
      %c0_56 = arith.constant 0 : index
      %87 = memref.load %arg8[%c0_55, %c0_56] : memref<1x1xf32, #tpu.memory_space<smem>>
      memref.store %cst_54, %arg8[%c0_55, %c0_56] : memref<1x1xf32, #tpu.memory_space<smem>>
    } else {
    }
    %c0 = arith.constant 0 : index
    %c0_1 = arith.constant 0 : index
    %c0_2 = arith.constant 0 : index
    %c0_3 = arith.constant 0 : index
    %3 = vector.load %arg1[%c0, %c0_1, %c0_2, %c0_3] : memref<1x4x16x16xf32, #tpu.memory_space<vmem>>, vector<1x4x16x16xf32>
    %4 = vector.shape_cast %3 : vector<1x4x16x16xf32> to vector<4x16x16xf32>
    %c0_4 = arith.constant 0 : index
    %c0_5 = arith.constant 0 : index
    %c0_6 = arith.constant 0 : index
    %c0_7 = arith.constant 0 : index
    %5 = vector.load %arg2[%c0_4, %c0_5, %c0_6, %c0_7] : memref<1x4x16x16xf32, #tpu.memory_space<vmem>>, vector<1x4x16x16xf32>
    %6 = vector.shape_cast %5 : vector<1x4x16x16xf32> to vector<4x16x16xf32>
    %7 = tpu.iota {dimensions = array<i32: 0>} : vector<16x16xi32>
    %8 = tpu.iota {dimensions = array<i32: 1>} : vector<16x16xi32>
    %c2_i32 = arith.constant 2 : i32
    %9 = vector.broadcast %c2_i32 : i32 to vector<16x16xi32>
    %10 = arith.cmpi sge, %7, %9 : vector<16x16xi32>
    %c14_i32 = arith.constant 14 : i32
    %11 = vector.broadcast %c14_i32 : i32 to vector<16x16xi32>
    %12 = arith.cmpi slt, %7, %11 : vector<16x16xi32>
    %13 = arith.andi %10, %12 : vector<16x16xi1>
    %c2_i32_8 = arith.constant 2 : i32
    %14 = vector.broadcast %c2_i32_8 : i32 to vector<16x16xi32>
    %15 = arith.cmpi sge, %8, %14 : vector<16x16xi32>
    %16 = arith.andi %13, %15 : vector<16x16xi1>
    %c14_i32_9 = arith.constant 14 : i32
    %17 = vector.broadcast %c14_i32_9 : i32 to vector<16x16xi32>
    %18 = arith.cmpi slt, %8, %17 : vector<16x16xi32>
    %19 = arith.andi %16, %18 : vector<16x16xi1>
    %20 = vector.shape_cast %19 : vector<16x16xi1> to vector<1x16x16xi1>
    %21 = arith.subf %6, %4 : vector<4x16x16xf32>
    %cst = arith.constant 0.000000e+00 : f32
    %22 = vector.shape_cast %20 : vector<1x16x16xi1> to vector<1x16x16xi1>
    %23 = vector.broadcast %22 : vector<1x16x16xi1> to vector<4x16x16xi1>
    %24 = vector.broadcast %cst : f32 to vector<4x16x16xf32>
    %25 = arith.select %23, %21, %24 : vector<4x16x16xi1>, vector<4x16x16xf32>
    %c0_10 = arith.constant 0 : index
    %c0_11 = arith.constant 0 : index
    %26 = memref.load %arg6[%c0_10, %c0_11] : memref<1x1xf32, #tpu.memory_space<smem>>
    %27 = arith.mulf %25, %25 : vector<4x16x16xf32>
    %28 = vector.shape_cast %27 : vector<4x16x16xf32> to vector<1x4x16x16xf32>
    %cst_12 = arith.constant dense<0.000000e+00> : vector<1xf32>
    %29 = vector.multi_reduction <add>, %28, %cst_12 [1, 2, 3] : vector<1x4x16x16xf32> to vector<1xf32>
    %30 = vector.shape_cast %29 : vector<1xf32> to vector<1x1x1x1xf32>
    %31 = vector.extract %30[0, 0, 0, 0] : f32 from vector<1x1x1x1xf32>
    %32 = arith.addf %26, %31 : f32
    %c0_13 = arith.constant 0 : index
    %c0_14 = arith.constant 0 : index
    %33 = memref.load %arg6[%c0_13, %c0_14] : memref<1x1xf32, #tpu.memory_space<smem>>
    memref.store %32, %arg6[%c0_13, %c0_14] : memref<1x1xf32, #tpu.memory_space<smem>>
    %c0_15 = arith.constant 0 : index
    %c0_16 = arith.constant 0 : index
    %c0_17 = arith.constant 0 : index
    %c0_18 = arith.constant 0 : index
    %34 = vector.load %arg3[%c0_15, %c0_16, %c0_17, %c0_18] : memref<1x4x16x16xf32, #tpu.memory_space<vmem>>, vector<1x4x16x16xf32>
    %35 = vector.shape_cast %34 : vector<1x4x16x16xf32> to vector<4x16x16xf32>
    %36 = arith.subf %35, %4 : vector<4x16x16xf32>
    %cst_19 = arith.constant 0.000000e+00 : f32
    %37 = vector.shape_cast %20 : vector<1x16x16xi1> to vector<1x16x16xi1>
    %38 = vector.broadcast %37 : vector<1x16x16xi1> to vector<4x16x16xi1>
    %39 = vector.broadcast %cst_19 : f32 to vector<4x16x16xf32>
    %40 = arith.select %38, %36, %39 : vector<4x16x16xi1>, vector<4x16x16xf32>
    %c0_20 = arith.constant 0 : index
    %c0_21 = arith.constant 0 : index
    %41 = memref.load %arg7[%c0_20, %c0_21] : memref<1x1xf32, #tpu.memory_space<smem>>
    %42 = arith.mulf %40, %40 : vector<4x16x16xf32>
    %43 = vector.shape_cast %42 : vector<4x16x16xf32> to vector<1x4x16x16xf32>
    %cst_22 = arith.constant dense<0.000000e+00> : vector<1xf32>
    %44 = vector.multi_reduction <add>, %43, %cst_22 [1, 2, 3] : vector<1x4x16x16xf32> to vector<1xf32>
    %45 = vector.shape_cast %44 : vector<1xf32> to vector<1x1x1x1xf32>
    %46 = vector.extract %45[0, 0, 0, 0] : f32 from vector<1x1x1x1xf32>
    %47 = arith.addf %41, %46 : f32
    %c0_23 = arith.constant 0 : index
    %c0_24 = arith.constant 0 : index
    %48 = memref.load %arg7[%c0_23, %c0_24] : memref<1x1xf32, #tpu.memory_space<smem>>
    memref.store %47, %arg7[%c0_23, %c0_24] : memref<1x1xf32, #tpu.memory_space<smem>>
    %c0_25 = arith.constant 0 : index
    %c0_26 = arith.constant 0 : index
    %c0_27 = arith.constant 0 : index
    %c0_28 = arith.constant 0 : index
    %49 = vector.load %arg4[%c0_25, %c0_26, %c0_27, %c0_28] : memref<1x1x16x16xf32, #tpu.memory_space<vmem>>, vector<1x1x16x16xf32>
    %50 = vector.shape_cast %49 : vector<1x1x16x16xf32> to vector<16x16xf32>
    %c0_29 = arith.constant 0 : index
    %c0_30 = arith.constant 0 : index
    %c0_31 = arith.constant 0 : index
    %c0_32 = arith.constant 0 : index
    %51 = vector.load %arg5[%c0_29, %c0_30, %c0_31, %c0_32] : memref<1x1x16x16xf32, #tpu.memory_space<vmem>>, vector<1x1x16x16xf32>
    %52 = vector.shape_cast %51 : vector<1x1x16x16xf32> to vector<16x16xf32>
    %c15_i32 = arith.constant 15 : i32
    %53 = tpu.dynamic_rotate %50 by %c15_i32 dim 0 : vector<16x16xf32>, i32 -> vector<16x16xf32>
    %cst_33 = arith.constant 2.000000e+00 : f32
    %54 = vector.broadcast %cst_33 : f32 to vector<16x16xf32>
    %55 = arith.mulf %54, %53 : vector<16x16xf32>
    %56 = arith.addf %50, %55 : vector<16x16xf32>
    %c14_i32_34 = arith.constant 14 : i32
    %57 = tpu.dynamic_rotate %50 by %c14_i32_34 dim 0 : vector<16x16xf32>, i32 -> vector<16x16xf32>
    %58 = arith.addf %56, %57 : vector<16x16xf32>
    %c14_i32_35 = arith.constant 14 : i32
    %59 = tpu.dynamic_rotate %58 by %c14_i32_35 dim 1 : vector<16x16xf32>, i32 -> vector<16x16xf32>
    %60 = arith.subf %59, %58 : vector<16x16xf32>
    %c15_i32_36 = arith.constant 15 : i32
    %61 = tpu.dynamic_rotate %52 by %c15_i32_36 dim 1 : vector<16x16xf32>, i32 -> vector<16x16xf32>
    %cst_37 = arith.constant 2.000000e+00 : f32
    %62 = vector.broadcast %cst_37 : f32 to vector<16x16xf32>
    %63 = arith.mulf %62, %61 : vector<16x16xf32>
    %64 = arith.addf %52, %63 : vector<16x16xf32>
    %c14_i32_38 = arith.constant 14 : i32
    %65 = tpu.dynamic_rotate %52 by %c14_i32_38 dim 1 : vector<16x16xf32>, i32 -> vector<16x16xf32>
    %66 = arith.addf %64, %65 : vector<16x16xf32>
    %c14_i32_39 = arith.constant 14 : i32
    %67 = tpu.dynamic_rotate %66 by %c14_i32_39 dim 0 : vector<16x16xf32>, i32 -> vector<16x16xf32>
    %68 = arith.subf %67, %66 : vector<16x16xf32>
    %c14_i32_40 = arith.constant 14 : i32
    %69 = vector.broadcast %c14_i32_40 : i32 to vector<16x16xi32>
    %70 = arith.cmpi slt, %7, %69 : vector<16x16xi32>
    %c14_i32_41 = arith.constant 14 : i32
    %71 = vector.broadcast %c14_i32_41 : i32 to vector<16x16xi32>
    %72 = arith.cmpi slt, %8, %71 : vector<16x16xi32>
    %73 = arith.andi %70, %72 : vector<16x16xi1>
    %c0_42 = arith.constant 0 : index
    %c0_43 = arith.constant 0 : index
    %74 = memref.load %arg8[%c0_42, %c0_43] : memref<1x1xf32, #tpu.memory_space<smem>>
    %75 = arith.addf %60, %68 : vector<16x16xf32>
    %76 = math.absf %75 : vector<16x16xf32>
    %cst_44 = arith.constant 0.000000e+00 : f32
    %77 = vector.broadcast %cst_44 : f32 to vector<16x16xf32>
    %78 = arith.select %73, %76, %77 : vector<16x16xi1>, vector<16x16xf32>
    %79 = vector.shape_cast %78 : vector<16x16xf32> to vector<1x16x16xf32>
    %cst_45 = arith.constant dense<0.000000e+00> : vector<1xf32>
    %80 = vector.multi_reduction <add>, %79, %cst_45 [1, 2] : vector<1x16x16xf32> to vector<1xf32>
    %81 = vector.shape_cast %80 : vector<1xf32> to vector<1x1x1xf32>
    %82 = vector.extract %81[0, 0, 0] : f32 from vector<1x1x1xf32>
    %83 = arith.addf %74, %82 : f32
    %c0_46 = arith.constant 0 : index
    %c0_47 = arith.constant 0 : index
    %84 = memref.load %arg8[%c0_46, %c0_47] : memref<1x1xf32, #tpu.memory_space<smem>>
    memref.store %83, %arg8[%c0_46, %c0_47] : memref<1x1xf32, #tpu.memory_space<smem>>
    return
  }
  func.func @transform_0(%arg0: i32) -> (i32, i32, i32, i32) {
    %c0_i32 = arith.constant 0 : i32
    %c0_i32_0 = arith.constant 0 : i32
    %c0_i32_1 = arith.constant 0 : i32
    %c0_i32_2 = arith.constant 0 : i32
    return %arg0, %c0_i32, %c0_i32_0, %c0_i32_1 : i32, i32, i32, i32
  }
  func.func @transform_1(%arg0: i32) -> (i32, i32, i32, i32) {
    %c0_i32 = arith.constant 0 : i32
    %c0_i32_0 = arith.constant 0 : i32
    %c0_i32_1 = arith.constant 0 : i32
    %c0_i32_2 = arith.constant 0 : i32
    return %arg0, %c0_i32, %c0_i32_0, %c0_i32_1 : i32, i32, i32, i32
  }
  func.func @transform_2(%arg0: i32) -> (i32, i32, i32, i32) {
    %c0_i32 = arith.constant 0 : i32
    %c0_i32_0 = arith.constant 0 : i32
    %c0_i32_1 = arith.constant 0 : i32
    %c0_i32_2 = arith.constant 0 : i32
    return %arg0, %c0_i32, %c0_i32_0, %c0_i32_1 : i32, i32, i32, i32
  }
  func.func @transform_3(%arg0: i32) -> (i32, i32, i32, i32) {
    %c0_i32 = arith.constant 0 : i32
    %c0_i32_0 = arith.constant 0 : i32
    %c0_i32_1 = arith.constant 0 : i32
    %c0_i32_2 = arith.constant 0 : i32
    return %arg0, %c0_i32, %c0_i32_0, %c0_i32_1 : i32, i32, i32, i32
  }
  func.func @transform_4(%arg0: i32) -> (i32, i32, i32, i32) {
    %c1_i32 = arith.constant 1 : i32
    %c0_i32 = arith.constant 0 : i32
    %c0_i32_0 = arith.constant 0 : i32
    %c0_i32_1 = arith.constant 0 : i32
    return %arg0, %c1_i32, %c0_i32, %c0_i32_0 : i32, i32, i32, i32
  }
  func.func @transform_5(%arg0: i32) -> (i32, i32) {
    %c0_i32 = arith.constant 0 : i32
    %c0_i32_0 = arith.constant 0 : i32
    %c0_i32_1 = arith.constant 0 : i32
    return %c0_i32, %c0_i32_0 : i32, i32
  }
  func.func @transform_6(%arg0: i32) -> (i32, i32) {
    %c0_i32 = arith.constant 0 : i32
    %c0_i32_0 = arith.constant 0 : i32
    %c0_i32_1 = arith.constant 0 : i32
    return %c0_i32, %c0_i32_0 : i32, i32
  }
  func.func @transform_7(%arg0: i32) -> (i32, i32) {
    %c0_i32 = arith.constant 0 : i32
    %c0_i32_0 = arith.constant 0 : i32
    %c0_i32_1 = arith.constant 0 : i32
    return %c0_i32, %c0_i32_0 : i32, i32
  }
}

</mosaic_0001>

<llo_original>
// kernel: tpu_custom_call.1
$region0: #{tpu_custom_call.1}
  #allocation0 [shape = 'u32[]', space=smem, size = 0x4, offset = 0x4, fixed_abs, tag = 'smem constant byte address 0x4 - core index']
  #allocation1 [shape = 'u32[72,128]{1,0:T(1,128)}', space=vmem, size = 0x9000, scoped, tag = 'internal scratch']
  %s0 = inlined_call_operand.hbm [shape: f32[2,4,16,16], index: 0, kind: input, shape index: {}]
  %s1 = inlined_call_operand.hbm [shape: f32[2,4,16,16], index: 1, kind: input, shape index: {}]
  %s2 = inlined_call_operand.hbm [shape: f32[2,4,16,16], index: 2, kind: input, shape index: {}]
  %s3 = inlined_call_operand.hbm [shape: f32[2,2,16,16], index: 3, kind: input, shape index: {}]
  %s4 = inlined_call_operand.hbm [shape: f32[2,2,16,16], index: 4, kind: input, shape index: {}]
  %s5 = inlined_call_operand.hbm [shape: f32[1,1], index: 5, kind: output, shape index: {0}]
  %s6 = inlined_call_operand.hbm [shape: f32[1,1], index: 6, kind: output, shape index: {1}]
  %s7 = inlined_call_operand.hbm [shape: f32[1,1], index: 7, kind: output, shape index: {2}]
  %8 = xla_tuple %s5, %s6, %s7
  %s9 = sld [smem:[#allocation0]]
  $region93: #{tpu_custom_call.1} parent=0
    _
  %s11 = ssub.s32 1, %s9
  %s12 = scalar_select 0, %s11, %s9
  $region1: #{tpu_custom_call.1} parent=0
    #allocation2 [shape = 'u8[65536]{0}', space=vmem, size = 0x10000, scoped, tag = 'input window, operand 0']
    #allocation3 [shape = 's32[2]{0}', space=sflag, size = 0x8, scoped, tag = 'scoped memory for tpu_custom_call.1']
    #allocation4 [shape = 's32[2]{0}', space=sflag, size = 0x8, scoped, tag = 'scoped memory for tpu_custom_call.1']
    #allocation5 [shape = 'u8[65536]{0}', space=vmem, size = 0x10000, scoped, tag = 'input window, operand 1']
    #allocation6 [shape = 's32[2]{0}', space=sflag, size = 0x8, scoped, tag = 'scoped memory for tpu_custom_call.1']
    #allocation7 [shape = 'u8[65536]{0}', space=vmem, size = 0x10000, scoped, tag = 'input window, operand 2']
    #allocation8 [shape = 'u8[16384]{0}', space=vmem, size = 0x4000, scoped, tag = 'input window, operand 3']
    #allocation9 [shape = 's32[2]{0}', space=sflag, size = 0x8, scoped, tag = 'scoped memory for tpu_custom_call.1']
    #allocation10 [shape = 'u8[16384]{0}', space=vmem, size = 0x4000, scoped, tag = 'input window, operand 4']
    #allocation11 [shape = 'u8[512]{0}', space=smem, size = 0x200, scoped, tag = 'output window, operand 0, single buffered']
    #allocation12 [shape = 'u8[512]{0}', space=smem, size = 0x200, scoped, tag = 'output window, operand 1, single buffered']
    #allocation13 [shape = 's32[1]{0}', space=sflag, size = 0x4, scoped, tag = 'scoped memory for tpu_custom_call.1']
    #allocation14 [shape = 'u8[512]{0}', space=smem, size = 0x200, scoped, tag = 'output window, operand 2, single buffered']
    %13 = vsyncpa [#allocation3], 0
    %s14 = scalar_lea.sflag [#allocation3], 1
    %15 = vsyncpa %s14, 0
    %16 = vsyncpa [#allocation6], 0
    %s17 = scalar_lea.sflag [#allocation6], 1
    %18 = vsyncpa %s17, 0
    %19 = vsyncpa [#allocation9], 0
    %s20 = scalar_lea.sflag [#allocation9], 1
    %21 = vsyncpa %s20, 0
    %22 = vsyncpa [#allocation4], 0
    %23 = vsyncpa [#allocation13], 0
    loop: start=0, step=1, limit=4
    $region2: #{tpu_custom_call.1} parent=1 // loop_pre_header
      _
    $region3: #{tpu_custom_call.1} parent=1 // loop_header
      %s25 = sphi 0, %s29
      %p26 = scmp.ge.s32.totalorder %s25, 4
      %s35 = sphi 0, %s37
      %s38 = sphi 0, %s35
      %s39 = sphi 0, %s38
      %s55 = sphi 0, %s39
      %s61 = sphi 0, %s63
      %s64 = sphi 0, %s61
      %s65 = sphi 0, %s64
      %s81 = sphi 0, %s65
      %s87 = sphi 0, %s89
      %s90 = sphi 0, %s87
      %s91 = sphi 0, %s90
      %s107 = sphi 0, %s91
      %s113 = sphi 0, %s115
      %s116 = sphi 0, %s113
      %s117 = sphi 0, %s116
      %s133 = sphi 0, %s117
      %s139 = sphi 0, %s141
      %s142 = sphi 0, %s139
      %s143 = sphi 0, %s142
      %s159 = sphi 0, %s143
      %s163 = sphi 0, %s163
      %s165 = sphi 0, %s163
      %s166 = sphi 0, %s165
      %s180 = sphi 0, %s166
      %s184 = sphi 0, %s184
      %s186 = sphi 0, %s184
      %s187 = sphi 0, %s186
      %s201 = sphi 0, %s187
      %s205 = sphi 0, %s205
      %s207 = sphi 0, %s205
      %s208 = sphi 0, %s207
      %s222 = sphi 0, %s208
    $region4: #{tpu_custom_call.1} parent=1 // loop_header_branch
      %28 = sbr.rel (%p26) target = $region8
    $region5: #{tpu_custom_call.1} parent=1 // loop_body
      %s30 = ssub.s32 %s25, 1
      %s31 = ssub.s32 %s25, 2
      %s32 = sadd.s32 %s25, 1
      %s33 = ssub.s32 %s25, %s32
      %p34 = scmp.eq.s32.totalorder %s33, 0
      %s36 = sadd.s32 %s35, 1
      %s37 = scalar_select %p34, %s35, %s36
      %p40 = pneg %p34
      %p41 = scmp.eq.s32.totalorder %s25, 1
      %p42 = por %p40, %p41
      %p43 = scmp.ne.s32.totalorder %s35, %s38
      %p44 = scmp.eq.s32.totalorder %s25, 0
      %p45 = por %p43, %p44
      %p46 = scmp.ne.s32.totalorder %s35, %s38
      %p47 = scmp.eq.s32.totalorder %s30, 1
      %p48 = por %p46, %p47
      %p49 = scmp.ne.s32.totalorder %s38, %s39
      %p50 = scmp.eq.s32.totalorder %s30, 0
      %p51 = por %p49, %p50
      %p52 = scmp.ne.s32.totalorder %s38, %s39
      %p53 = scmp.eq.s32.totalorder %s31, 1
      %p54 = por %p52, %p53
      %p56 = scmp.ne.s32.totalorder %s39, %s55
      %p57 = scmp.eq.s32.totalorder %s31, 0
      %p58 = por %p56, %p57
      %s59 = ssub.s32 %s25, %s32
      %p60 = scmp.eq.s32.totalorder %s59, 0
      %s62 = sadd.s32 %s61, 1
      %s63 = scalar_select %p60, %s61, %s62
      %p66 = pneg %p60
      %p67 = scmp.eq.s32.totalorder %s25, 1
      %p68 = por %p66, %p67
      %p69 = scmp.ne.s32.totalorder %s61, %s64
      %p70 = scmp.eq.s32.totalorder %s25, 0
      %p71 = por %p69, %p70
      %p72 = scmp.ne.s32.totalorder %s61, %s64
      %p73 = scmp.eq.s32.totalorder %s30, 1
      %p74 = por %p72, %p73
      %p75 = scmp.ne.s32.totalorder %s64, %s65
      %p76 = scmp.eq.s32.totalorder %s30, 0
      %p77 = por %p75, %p76
      %p78 = scmp.ne.s32.totalorder %s64, %s65
      %p79 = scmp.eq.s32.totalorder %s31, 1
      %p80 = por %p78, %p79
      %p82 = scmp.ne.s32.totalorder %s65, %s81
      %p83 = scmp.eq.s32.totalorder %s31, 0
      %p84 = por %p82, %p83
      %s85 = ssub.s32 %s25, %s32
      %p86 = scmp.eq.s32.totalorder %s85, 0
      %s88 = sadd.s32 %s87, 1
      %s89 = scalar_select %p86, %s87, %s88
      %p92 = pneg %p86
      %p93 = scmp.eq.s32.totalorder %s25, 1
      %p94 = por %p92, %p93
      %p95 = scmp.ne.s32.totalorder %s87, %s90
      %p96 = scmp.eq.s32.totalorder %s25, 0
      %p97 = por %p95, %p96
      %p98 = scmp.ne.s32.totalorder %s87, %s90
      %p99 = scmp.eq.s32.totalorder %s30, 1
      %p100 = por %p98, %p99
      %p101 = scmp.ne.s32.totalorder %s90, %s91
      %p102 = scmp.eq.s32.totalorder %s30, 0
      %p103 = por %p101, %p102
      %p104 = scmp.ne.s32.totalorder %s90, %s91
      %p105 = scmp.eq.s32.totalorder %s31, 1
      %p106 = por %p104, %p105
      %p108 = scmp.ne.s32.totalorder %s91, %s107
      %p109 = scmp.eq.s32.totalorder %s31, 0
      %p110 = por %p108, %p109
      %s111 = ssub.s32 %s25, %s32
      %p112 = scmp.eq.s32.totalorder %s111, 0
      %s114 = sadd.s32 %s113, 1
      %s115 = scalar_select %p112, %s113, %s114
      %p118 = pneg %p112
      %p119 = scmp.eq.s32.totalorder %s25, 1
      %p120 = por %p118, %p119
      %p121 = scmp.ne.s32.totalorder %s113, %s116
      %p122 = scmp.eq.s32.totalorder %s25, 0
      %p123 = por %p121, %p122
      %p124 = scmp.ne.s32.totalorder %s113, %s116
      %p125 = scmp.eq.s32.totalorder %s30, 1
      %p126 = por %p124, %p125
      %p127 = scmp.ne.s32.totalorder %s116, %s117
      %p128 = scmp.eq.s32.totalorder %s30, 0
      %p129 = por %p127, %p128
      %p130 = scmp.ne.s32.totalorder %s116, %s117
      %p131 = scmp.eq.s32.totalorder %s31, 1
      %p132 = por %p130, %p131
      %p134 = scmp.ne.s32.totalorder %s117, %s133
      %p135 = scmp.eq.s32.totalorder %s31, 0
      %p136 = por %p134, %p135
      %s137 = ssub.s32 %s25, %s32
      %p138 = scmp.eq.s32.totalorder %s137, 0
      %s140 = sadd.s32 %s139, 1
      %s141 = scalar_select %p138, %s139, %s140
      %p144 = pneg %p138
      %p145 = scmp.eq.s32.totalorder %s25, 1
      %p146 = por %p144, %p145
      %p147 = scmp.ne.s32.totalorder %s139, %s142
      %p148 = scmp.eq.s32.totalorder %s25, 0
      %p149 = por %p147, %p148
      %p150 = scmp.ne.s32.totalorder %s139, %s142
      %p151 = scmp.eq.s32.totalorder %s30, 1
      %p152 = por %p150, %p151
      %p153 = scmp.ne.s32.totalorder %s142, %s143
      %p154 = scmp.eq.s32.totalorder %s30, 0
      %p155 = por %p153, %p154
      %p156 = scmp.ne.s32.totalorder %s142, %s143
      %p157 = scmp.eq.s32.totalorder %s31, 1
      %p158 = por %p156, %p157
      %p160 = scmp.ne.s32.totalorder %s143, %s159
      %p161 = scmp.eq.s32.totalorder %s31, 0
      %p162 = por %p160, %p161
      %s164 = sadd.s32 %s163, 1
      %p167 = scmp.eq.s32.totalorder %s25, 1
      %p168 = scmp.ne.s32.totalorder %s163, %s165
      %p169 = scmp.eq.s32.totalorder %s25, 0
      %p170 = por %p168, %p169
      %p171 = scmp.ne.s32.totalorder %s163, %s165
      %p172 = scmp.eq.s32.totalorder %s30, 1
      %p173 = por %p171, %p172
      %p174 = scmp.ne.s32.totalorder %s165, %s166
      %p175 = scmp.eq.s32.totalorder %s30, 0
      %p176 = por %p174, %p175
      %p177 = scmp.ne.s32.totalorder %s165, %s166
      %p178 = scmp.eq.s32.totalorder %s31, 1
      %p179 = por %p177, %p178
      %p181 = scmp.ne.s32.totalorder %s166, %s180
      %p182 = scmp.eq.s32.totalorder %s31, 0
      %p183 = por %p181, %p182
      %s185 = sadd.s32 %s184, 1
      %p188 = scmp.eq.s32.totalorder %s25, 1
      %p189 = scmp.ne.s32.totalorder %s184, %s186
      %p190 = scmp.eq.s32.totalorder %s25, 0
      %p191 = por %p189, %p190
      %p192 = scmp.ne.s32.totalorder %s184, %s186
      %p193 = scmp.eq.s32.totalorder %s30, 1
      %p194 = por %p192, %p193
      %p195 = scmp.ne.s32.totalorder %s186, %s187
      %p196 = scmp.eq.s32.totalorder %s30, 0
      %p197 = por %p195, %p196
      %p198 = scmp.ne.s32.totalorder %s186, %s187
      %p199 = scmp.eq.s32.totalorder %s31, 1
      %p200 = por %p198, %p199
      %p202 = scmp.ne.s32.totalorder %s187, %s201
      %p203 = scmp.eq.s32.totalorder %s31, 0
      %p204 = por %p202, %p203
      %s206 = sadd.s32 %s205, 1
      %p209 = scmp.eq.s32.totalorder %s25, 1
      %p210 = scmp.ne.s32.totalorder %s205, %s207
      %p211 = scmp.eq.s32.totalorder %s25, 0
      %p212 = por %p210, %p211
      %p213 = scmp.ne.s32.totalorder %s205, %s207
      %p214 = scmp.eq.s32.totalorder %s30, 1
      %p215 = por %p213, %p214
      %p216 = scmp.ne.s32.totalorder %s207, %s208
      %p217 = scmp.eq.s32.totalorder %s30, 0
      %p218 = por %p216, %p217
      %p219 = scmp.ne.s32.totalorder %s207, %s208
      %p220 = scmp.eq.s32.totalorder %s31, 1
      %p221 = por %p219, %p220
      %p223 = scmp.ne.s32.totalorder %s208, %s222
      %p224 = scmp.eq.s32.totalorder %s31, 0
      %p225 = por %p223, %p224
      %p226 = scmp.le.s32.totalorder 1, %s25
      %p227 = scmp.lt.s32.totalorder %s25, 3
      %p228 = pnand %p226, %p227
      %p229 = pneg %p228
      // Predicated region
      $region9: #{tpu_custom_call.1} parent=5 // pred_check
        _
      $region10: #{tpu_custom_call.1} parent=5 // pred_check_branch
        %231 = sbr.rel (%p228) target = $region12
      $region11: #{tpu_custom_call.1} parent=5 // pred_region
        %s232 = ssub.s32 %s25, 1
      $region12: #{tpu_custom_call.1} parent=5 // pred_fallthru
        _
      %p233 = scmp.lt.s32.totalorder %s25, 2
      // Predicated region
      $region13: #{tpu_custom_call.1} parent=5 // pred_check
        %p234 = pneg %p233
      $region14: #{tpu_custom_call.1} parent=5 // pred_check_branch
        %236 = sbr.rel (%p234) target = $region16
      $region15: #{tpu_custom_call.1} parent=5 // pred_region
        // Predicated region
        $region17: #{tpu_custom_call.1} parent=15 // pred_check
          %p237 = pneg %p45
        $region18: #{tpu_custom_call.1} parent=15 // pred_check_branch
          %239 = sbr.rel (%p237) target = $region20
        $region19: #{tpu_custom_call.1} parent=15 // pred_region
          %s240 = sand.u32 %s35, 1
          %s241 = scalar_lea.sflag [#allocation3], %s240
          %s242 = sand.u32 %s35, 1
          %s243 = smul.addr %s242, 64
          %s244 = scalar_lea.vmem [#allocation2], %s243
          %246 = vsyncadd %s241, 0
          %s247 = smul.addr %s25, 8
          %s248 = smul.addr %s247, 8
          %s249 = scalar_lea.hbm %s0, %s248
          %s250 = sshll.u32 %s249, 4
          %s251 = int_to_ptr.hbm [resolvable:$true] %s250
          %s252 = sshll.u32 %s244, 4
          %s253 = int_to_ptr.vmem [resolvable:$true] %s252
          %258 = dma.hbm_to_vmem [thread:$0]  %s251, 1024, %s253, %s241, 128, 128, 8
        $region20: #{tpu_custom_call.1} parent=15 // pred_fallthru
          _
        // Predicated region
        $region21: #{tpu_custom_call.1} parent=15 // pred_check
          %p259 = pneg %p71
        $region22: #{tpu_custom_call.1} parent=15 // pred_check_branch
          %261 = sbr.rel (%p259) target = $region24
        $region23: #{tpu_custom_call.1} parent=15 // pred_region
          %s262 = sand.u32 %s25, 1
          %s263 = scalar_lea.sflag [#allocation6], %s262
          %s264 = sand.u32 %s61, 1
          %s265 = smul.addr %s264, 64
          %s266 = scalar_lea.vmem [#allocation5], %s265
          %268 = vsyncadd %s263, 0
          %s269 = smul.addr %s25, 8
          %s270 = smul.addr %s269, 8
          %s271 = scalar_lea.hbm %s1, %s270
          %s272 = sshll.u32 %s271, 4
          %s273 = int_to_ptr.hbm [resolvable:$true] %s272
          %s274 = sshll.u32 %s266, 4
          %s275 = int_to_ptr.vmem [resolvable:$true] %s274
          %280 = dma.hbm_to_vmem [thread:$0]  %s273, 1024, %s275, %s263, 128, 128, 8
        $region24: #{tpu_custom_call.1} parent=15 // pred_fallthru
          _
        // Predicated region
        $region25: #{tpu_custom_call.1} parent=15 // pred_check
          %p281 = pneg %p97
        $region26: #{tpu_custom_call.1} parent=15 // pred_check_branch
          %283 = sbr.rel (%p281) target = $region28
        $region27: #{tpu_custom_call.1} parent=15 // pred_region
          %s284 = sand.u32 %s25, 1
          %s285 = scalar_lea.sflag [#allocation6], %s284
          %s286 = sand.u32 %s87, 1
          %s287 = smul.addr %s286, 64
          %s288 = scalar_lea.vmem [#allocation7], %s287
          %290 = vsyncadd %s285, 0
          %s291 = smul.addr %s25, 8
          %s292 = smul.addr %s291, 8
          %s293 = scalar_lea.hbm %s2, %s292
          %s294 = sshll.u32 %s293, 4
          %s295 = int_to_ptr.hbm [resolvable:$true] %s294
          %s296 = sshll.u32 %s288, 4
          %s297 = int_to_ptr.vmem [resolvable:$true] %s296
          %302 = dma.hbm_to_vmem [thread:$0]  %s295, 1024, %s297, %s285, 128, 128, 8
        $region28: #{tpu_custom_call.1} parent=15 // pred_fallthru
          _
        // Predicated region
        $region29: #{tpu_custom_call.1} parent=15 // pred_check
          %p303 = pneg %p123
        $region30: #{tpu_custom_call.1} parent=15 // pred_check_branch
          %305 = sbr.rel (%p303) target = $region32
        $region31: #{tpu_custom_call.1} parent=15 // pred_region
          %s306 = sand.u32 %s25, 1
          %s307 = scalar_lea.sflag [#allocation9], %s306
          %s308 = sand.u32 %s113, 1
          %s309 = smul.addr %s308, 16
          %s310 = scalar_lea.vmem [#allocation8], %s309
          %312 = vsyncadd %s307, 0
          %s313 = smul.addr %s25, 4
          %s314 = smul.addr %s313, 8
          %s315 = scalar_lea.hbm %s3, %s314
          %s316 = sshll.u32 %s315, 4
          %s317 = int_to_ptr.hbm [resolvable:$true] %s316
          %s318 = sshll.u32 %s310, 4
          %s319 = int_to_ptr.vmem [resolvable:$true] %s318
          %324 = dma.hbm_to_vmem [thread:$0]  %s317, 256, %s319, %s307, 128, 128, 8
        $region32: #{tpu_custom_call.1} parent=15 // pred_fallthru
          _
        // Predicated region
        $region33: #{tpu_custom_call.1} parent=15 // pred_check
          %p325 = pneg %p149
        $region34: #{tpu_custom_call.1} parent=15 // pred_check_branch
          %327 = sbr.rel (%p325) target = $region36
        $region35: #{tpu_custom_call.1} parent=15 // pred_region
          %s328 = sand.u32 %s25, 1
          %s329 = scalar_lea.sflag [#allocation9], %s328
          %s330 = sand.u32 %s139, 1
          %s331 = smul.addr %s330, 16
          %s332 = scalar_lea.vmem [#allocation10], %s331
          %334 = vsyncadd %s329, 0
          %s335 = smul.addr %s25, 4
          %s336 = sadd.s32 2, %s335
          %s337 = smul.addr %s336, 8
          %s338 = scalar_lea.hbm %s4, %s337
          %s339 = sshll.u32 %s338, 4
          %s340 = int_to_ptr.hbm [resolvable:$true] %s339
          %s341 = sshll.u32 %s332, 4
          %s342 = int_to_ptr.vmem [resolvable:$true] %s341
          %347 = dma.hbm_to_vmem [thread:$0]  %s340, 256, %s342, %s329, 128, 128, 8
        $region36: #{tpu_custom_call.1} parent=15 // pred_fallthru
          _
      $region16: #{tpu_custom_call.1} parent=5 // pred_fallthru
        _
      %p348 = scmp.le.s32.totalorder 1, %s25
      %p349 = scmp.lt.s32.totalorder %s25, 3
      %p350 = pnand %p348, %p349
      %p351 = pneg %p350
      // Predicated region
      $region37: #{tpu_custom_call.1} parent=5 // pred_check
        _
      $region38: #{tpu_custom_call.1} parent=5 // pred_check_branch
        %353 = sbr.rel (%p350) target = $region40
      $region39: #{tpu_custom_call.1} parent=5 // pred_region
        %s354 = ssub.s32 %s25, 1
        %s355 = sand.u32 %s38, 1
        %s356 = scalar_lea.sflag [#allocation3], %s355
        %s357 = sand.u32 %s38, 1
        %s358 = smul.addr %s357, 64
        %s359 = scalar_lea.vmem [#allocation2], %s358
        // Predicated region
        $region41: #{tpu_custom_call.1} parent=39 // pred_check
          %p360 = pneg %p51
        $region42: #{tpu_custom_call.1} parent=39 // pred_check_branch
          %362 = sbr.rel (%p360) target = $region44
        $region43: #{tpu_custom_call.1} parent=39 // pred_region
          %364 = dma.done %s356, 1024
        $region44: #{tpu_custom_call.1} parent=39 // pred_fallthru
          _
        %s365 = sand.u32 %s30, 1
        %s366 = scalar_lea.sflag [#allocation6], %s365
        %s367 = sand.u32 %s64, 1
        %s368 = smul.addr %s367, 64
        %s369 = scalar_lea.vmem [#allocation5], %s368
        // Predicated region
        $region45: #{tpu_custom_call.1} parent=39 // pred_check
          %p370 = pneg %p77
        $region46: #{tpu_custom_call.1} parent=39 // pred_check_branch
          %372 = sbr.rel (%p370) target = $region48
        $region47: #{tpu_custom_call.1} parent=39 // pred_region
          %374 = dma.done %s366, 1024
        $region48: #{tpu_custom_call.1} parent=39 // pred_fallthru
          _
        %s375 = sand.u32 %s30, 1
        %s376 = scalar_lea.sflag [#allocation6], %s375
        %s377 = sand.u32 %s90, 1
        %s378 = smul.addr %s377, 64
        %s379 = scalar_lea.vmem [#allocation7], %s378
        // Predicated region
        $region49: #{tpu_custom_call.1} parent=39 // pred_check
          %p380 = pneg %p103
        $region50: #{tpu_custom_call.1} parent=39 // pred_check_branch
          %382 = sbr.rel (%p380) target = $region52
        $region51: #{tpu_custom_call.1} parent=39 // pred_region
          %384 = dma.done %s376, 1024
        $region52: #{tpu_custom_call.1} parent=39 // pred_fallthru
          _
        %s385 = sand.u32 %s30, 1
        %s386 = scalar_lea.sflag [#allocation9], %s385
        %s387 = sand.u32 %s116, 1
        %s388 = smul.addr %s387, 16
        %s389 = scalar_lea.vmem [#allocation8], %s388
        // Predicated region
        $region53: #{tpu_custom_call.1} parent=39 // pred_check
          %p390 = pneg %p129
        $region54: #{tpu_custom_call.1} parent=39 // pred_check_branch
          %392 = sbr.rel (%p390) target = $region56
        $region55: #{tpu_custom_call.1} parent=39 // pred_region
          %394 = dma.done %s386, 256
        $region56: #{tpu_custom_call.1} parent=39 // pred_fallthru
          _
        %s395 = sand.u32 %s30, 1
        %s396 = scalar_lea.sflag [#allocation9], %s395
        %s397 = sand.u32 %s142, 1
        %s398 = smul.addr %s397, 16
        %s399 = scalar_lea.vmem [#allocation10], %s398
        // Predicated region
        $region57: #{tpu_custom_call.1} parent=39 // pred_check
          %p400 = pneg %p155
        $region58: #{tpu_custom_call.1} parent=39 // pred_check_branch
          %402 = sbr.rel (%p400) target = $region60
        $region59: #{tpu_custom_call.1} parent=39 // pred_region
          %404 = dma.done %s396, 256
        $region60: #{tpu_custom_call.1} parent=39 // pred_fallthru
          _
        %s405 = sand.u32 %s38, 1
        %s406 = scalar_lea.sflag [#allocation3], %s405
        %s407 = sand.u32 %s38, 1
        %s408 = smul.addr %s407, 64
        %s409 = scalar_lea.vmem [#allocation2], %s408
        %p410 = pneg %p51
        %p411 = pneg %p48
        %s412 = sand.u32 %s30, 1
        %s413 = scalar_lea.sflag [#allocation6], %s412
        %s414 = sand.u32 %s64, 1
        %s415 = smul.addr %s414, 64
        %s416 = scalar_lea.vmem [#allocation5], %s415
        %p417 = pneg %p77
        %p418 = pneg %p74
        %s419 = sand.u32 %s30, 1
        %s420 = scalar_lea.sflag [#allocation6], %s419
        %s421 = sand.u32 %s90, 1
        %s422 = smul.addr %s421, 64
        %s423 = scalar_lea.vmem [#allocation7], %s422
        %p424 = pneg %p103
        %p425 = pneg %p100
        %s426 = sand.u32 %s30, 1
        %s427 = scalar_lea.sflag [#allocation9], %s426
        %s428 = sand.u32 %s116, 1
        %s429 = smul.addr %s428, 16
        %s430 = scalar_lea.vmem [#allocation8], %s429
        %p431 = pneg %p129
        %p432 = pneg %p126
        %s433 = sand.u32 %s30, 1
        %s434 = scalar_lea.sflag [#allocation9], %s433
        %s435 = sand.u32 %s142, 1
        %s436 = smul.addr %s435, 16
        %s437 = scalar_lea.vmem [#allocation10], %s436
        %p438 = pneg %p155
        %p439 = pneg %p152
        %p440 = pneg %p176
        %p441 = pneg %p173
        %p442 = pneg %p197
        %p443 = pneg %p194
        %p444 = pneg %p218
        %p445 = pneg %p215
        %p446 = scmp.eq.s32.totalorder %s30, 0
        // Predicated region
        $region61: #{tpu_custom_call.1} parent=39 // pred_check
          %p447 = pneg %p446
        $region62: #{tpu_custom_call.1} parent=39 // pred_check_branch
          %449 = sbr.rel (%p447) target = $region64
        $region63: #{tpu_custom_call.1} parent=39 // pred_region
          %s450 = scalar_lea.smem [#allocation11], 0
          %451 = sst [smem:[%s450]] 0.0
          %s452 = scalar_lea.smem [#allocation12], 0
          %453 = sst [smem:[%s452]] 0.0
          %s454 = scalar_lea.smem [#allocation14], 0
          %455 = sst [smem:[%s454]] 0.0
        $region64: #{tpu_custom_call.1} parent=39 // pred_fallthru
          _
        %v456 = vld [vmem:[%s359] sm:$0xff]
        %v457 = vld [vmem:[%s359 + $0x8] sm:$0xff]
        %v458 = vld [vmem:[%s359 + $0x10] sm:$0xff]
        %v459 = vld [vmem:[%s359 + $0x18] sm:$0xff]
        %v460 = vld [vmem:[%s359 + $0x20] sm:$0xff]
        %v461 = vld [vmem:[%s359 + $0x28] sm:$0xff]
        %v462 = vld [vmem:[%s359 + $0x30] sm:$0xff]
        %v463 = vld [vmem:[%s359 + $0x38] sm:$0xff]
        %v464 = vld [vmem:[%s369] sm:$0xff]
        %v465 = vld [vmem:[%s369 + $0x8] sm:$0xff]
        %v466 = vld [vmem:[%s369 + $0x10] sm:$0xff]
        %v467 = vld [vmem:[%s369 + $0x18] sm:$0xff]
        %v468 = vld [vmem:[%s369 + $0x20] sm:$0xff]
        %v469 = vld [vmem:[%s369 + $0x28] sm:$0xff]
        %v470 = vld [vmem:[%s369 + $0x30] sm:$0xff]
        %v471 = vld [vmem:[%s369 + $0x38] sm:$0xff]
        %v472 = vlaneseq
        %v473 = vshrl.u32 %v472, 7
        %v474 = vadd.s32 %v473, 8
        %v475 = vlaneseq
        %v476 = vand.u32 %v475, 127
        %vm477 = vcmp.ge.s32.totalorder %v473, 2
        %vm478 = vcmp.ge.s32.totalorder %v474, 2
        %vm479 = vcmp.lt.s32.totalorder %v473, 14
        %vm480 = vcmp.lt.s32.totalorder %v474, 14
        %vm481 = vmand %vm477, %vm479
        %vm482 = vmand %vm478, %vm480
        %vm483 = vcmp.ge.s32.totalorder %v476, 2
        %vm484 = vmand %vm481, %vm483
        %vm485 = vmand %vm482, %vm483
        %vm486 = vcmp.lt.s32.totalorder %v476, 14
        %vm487 = vmand %vm484, %vm486
        %vm488 = vmand %vm485, %vm486
        %v489 = vsub.f32 %v464, %v456
        %v490 = vsub.f32 %v465, %v457
        %v491 = vsub.f32 %v466, %v458
        %v492 = vsub.f32 %v467, %v459
        %v493 = vsub.f32 %v468, %v460
        %v494 = vsub.f32 %v469, %v461
        %v495 = vsub.f32 %v470, %v462
        %v496 = vsub.f32 %v471, %v463
        %v497 = vsel %vm487, 1, 0
        %v498 = vsel %vm488, 1, 0
        %vm499 = vcmp.eq.s32.totalorder %v497, 1
        %vm500 = vcmp.eq.s32.totalorder %v498, 1
        %v501 = vsel %vm499, %v489, 0.0
        %v502 = vsel %vm500, %v490, 0.0
        %v503 = vsel %vm499, %v491, 0.0
        %v504 = vsel %vm500, %v492, 0.0
        %v505 = vsel %vm499, %v493, 0.0
        %v506 = vsel %vm500, %v494, 0.0
        %v507 = vsel %vm499, %v495, 0.0
        %v508 = vsel %vm500, %v496, 0.0
        %s509 = sld [smem:[#allocation11]]
        %v510 = vmul.f32 %v501, %v501
        %v511 = vmul.f32 %v502, %v502
        %v512 = vmul.f32 %v503, %v503
        %v513 = vmul.f32 %v504, %v504
        %v514 = vmul.f32 %v505, %v505
        %v515 = vmul.f32 %v506, %v506
        %v516 = vmul.f32 %v507, %v507
        %v517 = vmul.f32 %v508, %v508
        %vm518 = vcmask 130048
        %v519 = vsel %vm518, %v510, 0.0
        %v520 = vsel %vm518, %v511, 0.0
        %v521 = vadd.f32 %v519, %v520
        %v522 = vsel %vm518, %v512, 0.0
        %v523 = vadd.f32 %v521, %v522
        %v524 = vsel %vm518, %v513, 0.0
        %v525 = vadd.f32 %v523, %v524
        %v526 = vsel %vm518, %v514, 0.0
        %v527 = vadd.f32 %v525, %v526
        %v528 = vsel %vm518, %v515, 0.0
        %v529 = vadd.f32 %v527, %v528
        %v530 = vsel %vm518, %v516, 0.0
        %v531 = vadd.f32 %v529, %v530
        %v532 = vsel %vm518, %v517, 0.0
        %v533 = vadd.f32 %v531, %v532
        %534 = vadd.xlane.f32.xlu0 %v533
        %v535 = vpop.xlane.xlu0 %534
        %v536 = vrot.slane %v535, 4
        %v537 = vadd.f32 %v535, %v536
        %v538 = vrot.slane %v537, 2
        %v539 = vadd.f32 %v537, %v538
        %v540 = vrot.slane %v539, 1
        %v541 = vadd.f32 %v539, %v540
        %s542 = vtos %v541
        %s543 = sadd.f32 %s509, %s542
        %s544 = scalar_lea.smem [#allocation11], 0
        %545 = sst [smem:[%s544]] %s543
        %v546 = vld [vmem:[%s379] sm:$0xff]
        %v547 = vld [vmem:[%s379 + $0x8] sm:$0xff]
        %v548 = vld [vmem:[%s379 + $0x10] sm:$0xff]
        %v549 = vld [vmem:[%s379 + $0x18] sm:$0xff]
        %v550 = vld [vmem:[%s379 + $0x20] sm:$0xff]
        %v551 = vld [vmem:[%s379 + $0x28] sm:$0xff]
        %v552 = vld [vmem:[%s379 + $0x30] sm:$0xff]
        %v553 = vld [vmem:[%s379 + $0x38] sm:$0xff]
        %v554 = vsub.f32 %v546, %v456
        %v555 = vsub.f32 %v547, %v457
        %v556 = vsub.f32 %v548, %v458
        %v557 = vsub.f32 %v549, %v459
        %v558 = vsub.f32 %v550, %v460
        %v559 = vsub.f32 %v551, %v461
        %v560 = vsub.f32 %v552, %v462
        %v561 = vsub.f32 %v553, %v463
        %v562 = vsel %vm499, %v554, 0.0
        %v563 = vsel %vm500, %v555, 0.0
        %v564 = vsel %vm499, %v556, 0.0
        %v565 = vsel %vm500, %v557, 0.0
        %v566 = vsel %vm499, %v558, 0.0
        %v567 = vsel %vm500, %v559, 0.0
        %v568 = vsel %vm499, %v560, 0.0
        %v569 = vsel %vm500, %v561, 0.0
        %s570 = sld [smem:[#allocation12]]
        %v571 = vmul.f32 %v562, %v562
        %v572 = vmul.f32 %v563, %v563
        %v573 = vmul.f32 %v564, %v564
        %v574 = vmul.f32 %v565, %v565
        %v575 = vmul.f32 %v566, %v566
        %v576 = vmul.f32 %v567, %v567
        %v577 = vmul.f32 %v568, %v568
        %v578 = vmul.f32 %v569, %v569
        %v579 = vsel %vm518, %v571, 0.0
        %v580 = vsel %vm518, %v572, 0.0
        %v581 = vadd.f32 %v579, %v580
        %v582 = vsel %vm518, %v573, 0.0
        %v583 = vadd.f32 %v581, %v582
        %v584 = vsel %vm518, %v574, 0.0
        %v585 = vadd.f32 %v583, %v584
        %v586 = vsel %vm518, %v575, 0.0
        %v587 = vadd.f32 %v585, %v586
        %v588 = vsel %vm518, %v576, 0.0
        %v589 = vadd.f32 %v587, %v588
        %v590 = vsel %vm518, %v577, 0.0
        %v591 = vadd.f32 %v589, %v590
        %v592 = vsel %vm518, %v578, 0.0
        %v593 = vadd.f32 %v591, %v592
        %594 = vadd.xlane.f32.xlu0 %v593
        %v595 = vpop.xlane.xlu0 %594
        %v596 = vrot.slane %v595, 4
        %v597 = vadd.f32 %v595, %v596
        %v598 = vrot.slane %v597, 2
        %v599 = vadd.f32 %v597, %v598
        %v600 = vrot.slane %v599, 1
        %v601 = vadd.f32 %v599, %v600
        %s602 = vtos %v601
        %s603 = sadd.f32 %s570, %s602
        %s604 = scalar_lea.smem [#allocation12], 0
        %605 = sst [smem:[%s604]] %s603
        %v606 = vld [vmem:[%s389] sm:$0xff]
        %v607 = vld [vmem:[%s389 + $0x8] sm:$0xff]
        %v608 = vld [vmem:[%s399] sm:$0xff]
        %v609 = vld [vmem:[%s399 + $0x8] sm:$0xff]
        %v610 = vrot.slane %v606, 1
        %v611 = vrot.slane %v607, 1
        %vm612 = vcmp.lt.s32.totalorder %v473, 7
        %v613 = vsel %vm612, %v610, %v611
        %v614 = vsel %vm612, %v611, %v610
        %v615 = vmul.f32 %v613, 2.0
        %v616 = vmul.f32 %v614, 2.0
        %v617 = vadd.f32 %v606, %v615
        %v618 = vadd.f32 %v607, %v616
        %v619 = vrot.slane %v606, 2
        %v620 = vrot.slane %v607, 2
        %vm621 = vcmp.lt.s32.totalorder %v473, 6
        %v622 = vsel %vm621, %v619, %v620
        %v623 = vsel %vm621, %v620, %v619
        %v624 = vadd.f32 %v617, %v622
        %v625 = vadd.f32 %v618, %v623
        %vm626 = vcmask 1047680
        %627 = vrot.lane.b32.xlu0 %v624, 16
        %v628 = vpop.permute.xlu0 %627
        %v629 = vsel %vm626, %v628, %v624
        %630 = vrot.lane.b32.xlu0 %v625, 16
        %v631 = vpop.permute.xlu0 %630
        %v632 = vsel %vm626, %v631, %v625
        %633 = vrot.lane.b32.xlu0 %v629, 16
        %v634 = vpop.permute.xlu0 %633
        %635 = vrot.lane.b32.xlu0 %v632, 16
        %v636 = vpop.permute.xlu0 %635
        %v637 = vsel %vm626, %v634, %v624
        %v638 = vsel %vm626, %v636, %v625
        %641 = vrot.lane.b32.xlu0 %v624, 2
        %v642 = vpop.permute.xlu0 %641
        %643 = vrot.lane.b32.xlu0 %v625, 2
        %v644 = vpop.permute.xlu0 %643
        %v647 = vsub.f32 %v637, %v642
        %v648 = vsub.f32 %v638, %v644
        %649 = vrot.lane.b32.xlu0 %v608, 16
        %v650 = vpop.permute.xlu0 %649
        %v651 = vsel %vm626, %v650, %v608
        %652 = vrot.lane.b32.xlu0 %v609, 16
        %v653 = vpop.permute.xlu0 %652
        %v654 = vsel %vm626, %v653, %v609
        %655 = vrot.lane.b32.xlu0 %v651, 16
        %v656 = vpop.permute.xlu0 %655
        %657 = vrot.lane.b32.xlu0 %v654, 16
        %v658 = vpop.permute.xlu0 %657
        %v659 = vsel %vm626, %v656, %v608
        %v660 = vsel %vm626, %v658, %v609
        %v661 = vmul.f32 %v659, 2.0
        %v662 = vmul.f32 %v660, 2.0
        %665 = vrot.lane.b32.xlu0 %v661, 127
        %v666 = vpop.permute.xlu0 %665
        %667 = vrot.lane.b32.xlu0 %v662, 127
        %v668 = vpop.permute.xlu0 %667
        %v671 = vadd.f32 %v608, %v666
        %v672 = vadd.f32 %v609, %v668
        %675 = vrot.lane.b32.xlu0 %v659, 126
        %v676 = vpop.permute.xlu0 %675
        %677 = vrot.lane.b32.xlu0 %v660, 126
        %v678 = vpop.permute.xlu0 %677
        %v681 = vadd.f32 %v671, %v676
        %v682 = vadd.f32 %v672, %v678
        %v683 = vrot.slane %v681, 2
        %v684 = vrot.slane %v682, 2
        %v685 = vsel %vm621, %v683, %v684
        %v686 = vsel %vm621, %v684, %v683
        %v687 = vsub.f32 %v685, %v681
        %v688 = vsub.f32 %v686, %v682
        %vm689 = vmand %vm479, %vm486
        %vm690 = vmand %vm480, %vm486
        %s691 = sld [smem:[#allocation14]]
        %694 = vrot.lane.b32.xlu0 %v687, 2
        %v695 = vpop.permute.xlu0 %694
        %696 = vrot.lane.b32.xlu0 %v688, 2
        %v697 = vpop.permute.xlu0 %696
        %v700 = vadd.f32 %v647, %v695
        %v701 = vadd.f32 %v648, %v697
        %v702 = vand.u32 2147483647, %v700
        %v703 = vand.u32 2147483647, %v701
        %706 = vrot.lane.b32.xlu0 %v702, 126
        %v707 = vpop.permute.xlu0 %706
        %708 = vrot.lane.b32.xlu0 %v703, 126
        %v709 = vpop.permute.xlu0 %708
        %v712 = vsel %vm689, %v707, 0.0
        %v713 = vsel %vm690, %v709, 0.0
        %v714 = vsel %vm518, %v712, 0.0
        %v715 = vsel %vm518, %v713, 0.0
        %v716 = vadd.f32 %v714, %v715
        %717 = vadd.xlane.f32.xlu0 %v716
        %v718 = vpop.xlane.xlu0 %717
        %v719 = vrot.slane %v718, 4
        %v720 = vadd.f32 %v718, %v719
        %v721 = vrot.slane %v720, 2
        %v722 = vadd.f32 %v720, %v721
        %v723 = vrot.slane %v722, 1
        %v724 = vadd.f32 %v722, %v723
        %s725 = vtos %v724
        %s726 = sadd.f32 %s691, %s725
        %s727 = scalar_lea.smem [#allocation14], 0
        %728 = sst [smem:[%s727]] %s726
        // Predicated region
        $region65: #{tpu_custom_call.1} parent=39 // pred_check
          %p729 = pneg %p173
        $region66: #{tpu_custom_call.1} parent=39 // pred_check_branch
          %731 = sbr.rel (%p729) target = $region68
        $region67: #{tpu_custom_call.1} parent=39 // pred_region
          %733 = vsyncadd [#allocation4], 0
          %s735 = sshll.u32 %s5, 4
          %s736 = int_to_ptr.hbm [resolvable:$true] %s735
          %738 = dma.smem_to_hbm [#allocation11], 16, %s736, [#allocation4]
        $region68: #{tpu_custom_call.1} parent=39 // pred_fallthru
          _
        // Predicated region
        $region69: #{tpu_custom_call.1} parent=39 // pred_check
          %p739 = pneg %p194
        $region70: #{tpu_custom_call.1} parent=39 // pred_check_branch
          %741 = sbr.rel (%p739) target = $region72
        $region71: #{tpu_custom_call.1} parent=39 // pred_region
          %743 = vsyncadd [#allocation13], 0
          %s745 = sshll.u32 %s6, 4
          %s746 = int_to_ptr.hbm [resolvable:$true] %s745
          %748 = dma.smem_to_hbm [#allocation12], 16, %s746, [#allocation13]
        $region72: #{tpu_custom_call.1} parent=39 // pred_fallthru
          _
        // Predicated region
        $region73: #{tpu_custom_call.1} parent=39 // pred_check
          %p749 = pneg %p215
        $region74: #{tpu_custom_call.1} parent=39 // pred_check_branch
          %751 = sbr.rel (%p749) target = $region76
        $region75: #{tpu_custom_call.1} parent=39 // pred_region
          %753 = vsyncadd [#allocation13], 0
          %s755 = sshll.u32 %s7, 4
          %s756 = int_to_ptr.hbm [resolvable:$true] %s755
          %758 = dma.smem_to_hbm [#allocation14], 16, %s756, [#allocation13]
        $region76: #{tpu_custom_call.1} parent=39 // pred_fallthru
          _
        // Predicated region
        $region77: #{tpu_custom_call.1} parent=39 // pred_check
          %p759 = pneg %p173
        $region78: #{tpu_custom_call.1} parent=39 // pred_check_branch
          %761 = sbr.rel (%p759) target = $region80
        $region79: #{tpu_custom_call.1} parent=39 // pred_region
          %763 = dma.done [#allocation4], 16
        $region80: #{tpu_custom_call.1} parent=39 // pred_fallthru
          _
        // Predicated region
        $region81: #{tpu_custom_call.1} parent=39 // pred_check
          %p764 = pneg %p194
        $region82: #{tpu_custom_call.1} parent=39 // pred_check_branch
          %766 = sbr.rel (%p764) target = $region84
        $region83: #{tpu_custom_call.1} parent=39 // pred_region
          %768 = dma.done [#allocation13], 16
        $region84: #{tpu_custom_call.1} parent=39 // pred_fallthru
          _
        // Predicated region
        $region85: #{tpu_custom_call.1} parent=39 // pred_check
          %p769 = pneg %p215
        $region86: #{tpu_custom_call.1} parent=39 // pred_check_branch
          %771 = sbr.rel (%p769) target = $region88
        $region87: #{tpu_custom_call.1} parent=39 // pred_region
          %773 = dma.done [#allocation13], 16
        $region88: #{tpu_custom_call.1} parent=39 // pred_fallthru
          _
        %774 = sfence
      $region40: #{tpu_custom_call.1} parent=5 // pred_fallthru
        _
      %p775 = scmp.le.s32.totalorder 2, %s25
      // Predicated region
      $region89: #{tpu_custom_call.1} parent=5 // pred_check
        %p776 = pneg %p775
      $region90: #{tpu_custom_call.1} parent=5 // pred_check_branch
        %778 = sbr.rel (%p776) target = $region92
      $region91: #{tpu_custom_call.1} parent=5 // pred_region
        %s779 = ssub.s32 %s25, 2
      $region92: #{tpu_custom_call.1} parent=5 // pred_fallthru
        _
    $region6: #{tpu_custom_call.1} parent=1 // loop_footer
      %s29 = sadd.s32 1, %s25
    $region7: #{tpu_custom_call.1} parent=1 // loop_footer_branch
      %24 = sbr.rel target = $region3
    $region8: #{tpu_custom_call.1} parent=1 // loop_exit
      _
    %780 = vsyncpa [#allocation3], 1
    %s781 = scalar_lea.sflag [#allocation3], 1
    %782 = vsyncpa %s781, 1
    %783 = vsyncpa [#allocation6], 1
    %s784 = scalar_lea.sflag [#allocation6], 1
    %785 = vsyncpa %s784, 1
    %786 = vsyncpa [#allocation9], 1
    %s787 = scalar_lea.sflag [#allocation9], 1
    %788 = vsyncpa %s787, 1
    %789 = vsyncpa [#allocation4], 1
    %s790 = scalar_lea.sflag [#allocation4], 1
    %791 = vsyncpa %s790, 1
    %792 = vsyncpa [#allocation13], 1

</llo_original>
